<compile_context>
chip_gen: v7x
topology: tpu7x:2x2x1
jax: 0.10.0
libtpu: 0.0.40
codegen_flags: <defaults>
</compile_context>

<pallas_src>
import functools

import jax
import jax.numpy as jnp
from jax import lax
from jax.experimental import pallas as pl
from jax.experimental.pallas import tpu as pltpu

EPS = 1e-5
VMEM_LIMIT = 32 * 1024 * 1024      # safe on v5e/v6e (128MiB) and v7x (64MiB physical)
H_RESIDENT_BYTES = 4 * 1024 * 1024  # keep h fully VMEM-resident below this size


def _round_up(x, m):
    return ((x + m - 1) // m) * m


# --------------------------------------------------------------------------
# Kernel 1: h = ReLU(LayerNorm(feat)) over the *true* feature dim, once per
# node row-tile, written out lane-padded in bf16 for the adjacency matmul.
# --------------------------------------------------------------------------
def _norm_act_kernel(feat_ref, gamma_ref, beta_ref, h_ref, *, d_true):
    x = feat_ref[...]                                         # [TM, DP] f32 (pad lanes are 0)
    dp = x.shape[-1]
    lane = lax.broadcasted_iota(jnp.int32, (1, dp), 1)
    mask = (lane < d_true).astype(jnp.float32)                # [1, DP]
    inv_d = jnp.float32(1.0 / d_true)

    s = jnp.sum(x, axis=-1, keepdims=True)                    # pad lanes contribute 0
    mean = s * inv_d
    centered = (x - mean) * mask
    var = jnp.sum(centered * centered, axis=-1, keepdims=True) * inv_d
    h = centered * lax.rsqrt(var + EPS)
    h = h * gamma_ref[...] + beta_ref[...]                    # pad lanes stay 0 (gamma/beta pad = 0)
    h = jnp.maximum(h, 0.0)                                   # ReLU
    # dropout p=0.0 (eval) -> identity
    h_ref[...] = h.astype(h_ref.dtype)                        # bf16


# --------------------------------------------------------------------------
# Kernel 2: tiled GraphConv + residual.
#   acc[i] = sum_k adj[i,k] @ h[k]      (bf16 x bf16 -> f32 accumulate, MXU)
#   epilogue (k == last): out[i] = feat[i] + (acc[i] * inv_deg[i]) @ W + b
# h is either fully VMEM-resident (sliced per reduction step) or streamed in
# (tk, DP) tiles, selected statically by `h_resident`.
# --------------------------------------------------------------------------
def _conv_residual_kernel(adj_ref, h_ref, feat_ref, invdeg_ref, w_ref, b_ref,
                          out_ref, acc_ref, *, tk, h_resident):
    k = pl.program_id(1)

    @pl.when(k == 0)
    def _():
        acc_ref[...] = jnp.zeros_like(acc_ref)

    if h_resident:
        start = pl.multiple_of(k * tk, tk)                    # aligned dynamic sublane slice
        h_tile = h_ref[pl.ds(start, tk), :]
    else:
        h_tile = h_ref[...]

    acc_ref[...] += jnp.dot(adj_ref[...], h_tile,
                            preferred_element_type=jnp.float32)

    @pl.when(k == pl.num_programs(1) - 1)
    def _():
        agg = acc_ref[...] * invdeg_ref[...]                  # mean aggregation (1/deg precomputed)
        conv = jnp.dot(agg, w_ref[...],
                       preferred_element_type=jnp.float32) + b_ref[...]
        out_ref[...] = feat_ref[...] + conv                   # 'res+' residual


# --------------------------------------------------------------------------
# Wrapper: padding, bf16 adjacency stream, two pallas_calls.
# --------------------------------------------------------------------------
def deepergcn_layer(feat, adj, in_deg, gamma, beta, w, b, *, tm=128, tk=512):
    N, D = feat.shape
    assert tk % tm == 0
    DP = _round_up(D, 128)           # lane-dense feature dim
    NP = _round_up(N, tk)            # node dim padded to tile multiple

    # ---- host-side padding / dtype prep (zeros are exact, sliced off below) ----
    feat_p = jnp.zeros((NP, DP), jnp.float32).at[:N, :D].set(feat)
    adj_p = jnp.zeros((NP, NP), jnp.bfloat16).at[:N, :N].set(adj.astype(jnp.bfloat16))
    indeg_p = jnp.zeros((NP, 1), jnp.float32).at[:N, :].set(in_deg)
    invdeg_p = 1.0 / jnp.maximum(indeg_p, 1.0)                # exact host-side reciprocal
    gamma_p = jnp.zeros((1, DP), jnp.float32).at[:, :D].set(gamma)
    beta_p = jnp.zeros((1, DP), jnp.float32).at[:, :D].set(beta)
    w_p = jnp.zeros((DP, DP), jnp.float32).at[:D, :D].set(w)
    b_p = jnp.zeros((1, DP), jnp.float32).at[:, :D].set(b)

    # ---- pre-pass: h = relu(layernorm(feat)) once, as bf16 ----
    h_bf16 = pl.pallas_call(
        functools.partial(_norm_act_kernel, d_true=D),
        out_shape=jax.ShapeDtypeStruct((NP, DP), jnp.bfloat16),
        grid=(NP // tm,),
        in_specs=[
            pl.BlockSpec((tm, DP), lambda i: (i, 0)),
            pl.BlockSpec((1, DP), lambda i: (0, 0)),
            pl.BlockSpec((1, DP), lambda i: (0, 0)),
        ],
        out_specs=pl.BlockSpec((tm, DP), lambda i: (i, 0)),
        compiler_params=pltpu.CompilerParams(
            dimension_semantics=("parallel",),
            vmem_limit_bytes=VMEM_LIMIT),
    )(feat_p, gamma_p, beta_p)

    # ---- tiled GraphConv + residual ----
    h_resident = (NP * DP * 2) <= H_RESIDENT_BYTES            # keep h in VMEM for whole grid
    if h_resident:
        # Full-array block; index map constant over the grid => DMA'd once.
        h_spec = pl.BlockSpec((NP, DP), lambda i, k: (0, 0))
    else:
        # Streamed (tk, DP) tiles (re-fetched per row tile).
        h_spec = pl.BlockSpec((tk, DP), lambda i, k: (k, 0))

    out_p = pl.pallas_call(
        functools.partial(_conv_residual_kernel, tk=tk, h_resident=h_resident),
        out_shape=jax.ShapeDtypeStruct((NP, DP), jnp.float32),
        grid_spec=pltpu.PrefetchScalarGridSpec(
            num_scalar_prefetch=0,
            grid=(NP // tm, NP // tk),                         # reduction axis last
            in_specs=[
                pl.BlockSpec((tm, tk), lambda i, k: (i, k)),   # adj tile (bf16 stream)
                h_spec,                                        # h (resident or tiled, bf16)
                pl.BlockSpec((tm, DP), lambda i, k: (i, 0)),   # residual feat (const over k)
                pl.BlockSpec((tm, 1), lambda i, k: (i, 0)),    # 1/deg
                pl.BlockSpec((DP, DP), lambda i, k: (0, 0)),   # W (VMEM-resident)
                pl.BlockSpec((1, DP), lambda i, k: (0, 0)),    # b
            ],
            out_specs=pl.BlockSpec((tm, DP), lambda i, k: (i, 0)),
            scratch_shapes=[pltpu.VMEM((tm, DP), jnp.float32)],
        ),
        compiler_params=pltpu.CompilerParams(
            dimension_semantics=("parallel", "arbitrary"),
            vmem_limit_bytes=VMEM_LIMIT),
    )(adj_p, h_bf16, feat_p, invdeg_p, w_p, b_p)

    return out_p[:N, :D]


# --------------------------------------------------------------------------
# Pure-JAX f32 reference (matches the PyTorch 'res+' forward).
# --------------------------------------------------------------------------
def reference(feat, adj, in_deg, gamma, beta, w, b):
    mean = jnp.mean(feat, axis=-1, keepdims=True)
    var = jnp.mean((feat - mean) ** 2, axis=-1, keepdims=True)
    h = (feat - mean) / jnp.sqrt(var + EPS) * gamma + beta
    h = jnp.maximum(h, 0.0)
    agg = (adj @ h) / jnp.maximum(in_deg, 1.0)
    return feat + (agg @ w + b)


if __name__ == "__main__":
    N, D = 512, 32  # nodes, hidden dim

    key = jax.random.PRNGKey(0)
    k_feat, k_adj, k_w, k_g, k_b = jax.random.split(key, 5)

    feat = jax.random.normal(k_feat, (N, D), dtype=jnp.float32)

    # Synthetic dense adjacency (row i = in-edges of node i), ~10% density.
    adj = (jax.random.uniform(k_adj, (N, N)) < 0.1).astype(jnp.float32)
    in_deg = jnp.sum(adj, axis=1, keepdims=True)              # [N, 1]

    # Deterministic parameter init.
    gamma = 1.0 + 0.1 * jax.random.normal(k_g, (1, D), dtype=jnp.float32)
    beta = 0.1 * jax.random.normal(k_b, (1, D), dtype=jnp.float32)
    limit = 1.0 / jnp.sqrt(jnp.float32(D))
    w = jax.random.uniform(k_w, (D, D), dtype=jnp.float32,
                           minval=-limit, maxval=limit)
    b = jnp.zeros((1, D), dtype=jnp.float32)

    out = deepergcn_layer(feat, adj, in_deg, gamma, beta, w, b)
    out = jax.block_until_ready(out)

    ref = reference(feat, adj, in_deg, gamma, beta, w, b)
    assert out.shape == (N, D)
    # Tolerance accounts for the bf16 adjacency/h stream (adj is exact 0/1;
    # only h picks up bf16 rounding, accumulation is f32).
    assert jnp.allclose(out, ref, atol=5e-3, rtol=5e-3), "mismatch vs reference"

    print("KERNEL_OK")
</pallas_src>

<mosaic_0001>
module attributes {stable_mosaic.version = 11 : i64} {
  func.func @_norm_act_kernel(%arg0: i32, %arg1: memref<128x128xf32, #tpu.memory_space<vmem>>, %arg2: memref<1x128xf32, #tpu.memory_space<vmem>>, %arg3: memref<1x128xf32, #tpu.memory_space<vmem>>, %arg4: memref<128x128xbf16, #tpu.memory_space<vmem>>) attributes {dimension_semantics = [#tpu.dimension_semantics<parallel>], iteration_bounds = array<i64: 4>, scalar_prefetch = 0 : i64, scratch_operands = 0 : i64, tpu.core_type = #tpu.core_type<tc>, window_params = [{transform_indices = @transform_0, window_bounds = array<i64: 128, 128>}, {pipeline_mode = #tpu.pipeline_mode<synchronous>, transform_indices = @transform_1, window_bounds = array<i64: 1, 128>}, {pipeline_mode = #tpu.pipeline_mode<synchronous>, transform_indices = @transform_2, window_bounds = array<i64: 1, 128>}, {transform_indices = @transform_3, window_bounds = array<i64: 128, 128>}]} {
    %c0 = arith.constant 0 : index
    %c0_0 = arith.constant 0 : index
    %0 = vector.load %arg1[%c0, %c0_0] : memref<128x128xf32, #tpu.memory_space<vmem>>, vector<128x128xf32>
    %1 = tpu.iota {dimensions = array<i32: 1>} : vector<1x128xi32>
    %c32_i32 = arith.constant 32 : i32
    %2 = vector.broadcast %c32_i32 : i32 to vector<1x128xi32>
    %3 = arith.cmpi slt, %1, %2 : vector<1x128xi32>
    %4 = arith.extui %3 : vector<1x128xi1> to vector<1x128xi32>
    %5 = arith.sitofp %4 : vector<1x128xi32> to vector<1x128xf32>
    %cst = arith.constant dense<0.000000e+00> : vector<128xf32>
    %6 = vector.multi_reduction <add>, %0, %cst [1] : vector<128x128xf32> to vector<128xf32>
    %7 = vector.shape_cast %6 : vector<128xf32> to vector<128x1xf32>
    %cst_1 = arith.constant 3.125000e-02 : f32
    %8 = vector.broadcast %cst_1 : f32 to vector<128x1xf32>
    %9 = arith.mulf %7, %8 : vector<128x1xf32>
    %10 = vector.broadcast %9 : vector<128x1xf32> to vector<128x128xf32>
    %11 = arith.subf %0, %10 : vector<128x128xf32>
    %12 = vector.broadcast %5 : vector<1x128xf32> to vector<128x128xf32>
    %13 = arith.mulf %11, %12 : vector<128x128xf32>
    %14 = arith.mulf %13, %13 : vector<128x128xf32>
    %cst_2 = arith.constant dense<0.000000e+00> : vector<128xf32>
    %15 = vector.multi_reduction <add>, %14, %cst_2 [1] : vector<128x128xf32> to vector<128xf32>
    %16 = vector.shape_cast %15 : vector<128xf32> to vector<128x1xf32>
    %cst_3 = arith.constant 3.125000e-02 : f32
    %17 = vector.broadcast %cst_3 : f32 to vector<128x1xf32>
    %18 = arith.mulf %16, %17 : vector<128x1xf32>
    %cst_4 = arith.constant 9.99999974E-6 : f32
    %19 = vector.broadcast %cst_4 : f32 to vector<128x1xf32>
    %20 = arith.addf %18, %19 : vector<128x1xf32>
    %21 = math.rsqrt %20 : vector<128x1xf32>
    %22 = vector.broadcast %21 : vector<128x1xf32> to vector<128x128xf32>
    %23 = arith.mulf %13, %22 : vector<128x128xf32>
    %c0_5 = arith.constant 0 : index
    %c0_6 = arith.constant 0 : index
    %24 = vector.load %arg2[%c0_5, %c0_6] : memref<1x128xf32, #tpu.memory_space<vmem>>, vector<1x128xf32>
    %25 = vector.broadcast %24 : vector<1x128xf32> to vector<128x128xf32>
    %26 = arith.mulf %23, %25 : vector<128x128xf32>
    %c0_7 = arith.constant 0 : index
    %c0_8 = arith.constant 0 : index
    %27 = vector.load %arg3[%c0_7, %c0_8] : memref<1x128xf32, #tpu.memory_space<vmem>>, vector<1x128xf32>
    %28 = vector.broadcast %27 : vector<1x128xf32> to vector<128x128xf32>
    %29 = arith.addf %26, %28 : vector<128x128xf32>
    %cst_9 = arith.constant 0.000000e+00 : f32
    %30 = vector.broadcast %cst_9 : f32 to vector<128x128xf32>
    %31 = arith.maximumf %29, %30 : vector<128x128xf32>
    %32 = arith.truncf %31 : vector<128x128xf32> to vector<128x128xbf16>
    %c0_10 = arith.constant 0 : index
    %c0_11 = arith.constant 0 : index
    %33 = vector.load %arg4[%c0_10, %c0_11] : memref<128x128xbf16, #tpu.memory_space<vmem>>, vector<128x128xbf16>
    tpu.vector_store %arg4[%c0_10, %c0_11], %32 {strides = array<i32>} : memref<128x128xbf16, #tpu.memory_space<vmem>>, vector<128x128xbf16>,
    return
  }
  func.func @transform_0(%arg0: i32) -> (i32, i32) {
    %c0_i32 = arith.constant 0 : i32
    %c0_i32_0 = arith.constant 0 : i32
    return %arg0, %c0_i32 : i32, i32
  }
  func.func @transform_1(%arg0: i32) -> (i32, i32) {
    %c0_i32 = arith.constant 0 : i32
    %c0_i32_0 = arith.constant 0 : i32
    %c0_i32_1 = arith.constant 0 : i32
    return %c0_i32, %c0_i32_0 : i32, i32
  }
  func.func @transform_2(%arg0: i32) -> (i32, i32) {
    %c0_i32 = arith.constant 0 : i32
    %c0_i32_0 = arith.constant 0 : i32
    %c0_i32_1 = arith.constant 0 : i32
    return %c0_i32, %c0_i32_0 : i32, i32
  }
  func.func @transform_3(%arg0: i32) -> (i32, i32) {
    %c0_i32 = arith.constant 0 : i32
    %c0_i32_0 = arith.constant 0 : i32
    return %arg0, %c0_i32 : i32, i32
  }
}

</mosaic_0001>

<llo_original>
// kernel: tpu_custom_call.1
$region0: #{tpu_custom_call.1}
  #allocation0 [shape = 'u32[]', space=smem, size = 0x4, offset = 0x4, fixed_abs, tag = 'smem constant byte address 0x4 - core index']
  #allocation1 [shape = 'u32[144,128]{1,0:T(1,128)}', space=vmem, size = 0x12000, scoped, tag = 'internal scratch']
  %s0 = inlined_call_operand.hbm [shape: f32[512,128], index: 0, kind: input, shape index: {}]
  %s1 = inlined_call_operand.vmem [shape: f32[1,128], index: 1, kind: input, shape index: {}]
  %s2 = inlined_call_operand.vmem [shape: f32[1,128], index: 2, kind: input, shape index: {}]
  %s3 = inlined_call_operand.hbm [shape: bf16[512,128], index: 3, kind: output, shape index: {}]
  %s4 = sld [smem:[#allocation0]]
  $region49: #{tpu_custom_call.1} parent=0
    _
  %s6 = ssub.s32 1, %s4
  %s7 = scalar_select 0, %s6, %s4
  $region1: #{tpu_custom_call.1} parent=0
    #allocation2 [shape = 'u8[131072]{0}', space=vmem, size = 0x20000, scoped, tag = 'input window, operand 0']
    #allocation3 [shape = 's32[2]{0}', space=sflag, size = 0x8, scoped, tag = 'scoped memory for tpu_custom_call.1']
    #allocation4 [shape = 's32[2]{0}', space=sflag, size = 0x8, scoped, tag = 'scoped memory for tpu_custom_call.1']
    #allocation5 [shape = 'u8[65536]{0}', space=vmem, size = 0x10000, scoped, tag = 'output window, operand 0']
    %8 = vsyncpa [#allocation3], 0
    %s9 = scalar_lea.sflag [#allocation3], 1
    %10 = vsyncpa %s9, 0
    %11 = vsyncpa [#allocation4], 0
    %s12 = scalar_lea.sflag [#allocation4], 1
    %13 = vsyncpa %s12, 0
    loop: start=0, step=1, limit=6
    $region2: #{tpu_custom_call.1} parent=1 // loop_pre_header
      _
    $region3: #{tpu_custom_call.1} parent=1 // loop_header
      %s15 = sphi 0, %s19
      %p16 = scmp.ge.s32.totalorder %s15, 6
      %s25 = sphi 0, %s27
      %s28 = sphi 0, %s25
      %s29 = sphi 0, %s28
      %s45 = sphi 0, %s29
      %s49 = sphi 0, %s49
      %s51 = sphi 0, %s49
      %s52 = sphi 0, %s51
      %s66 = sphi 0, %s52
      %s70 = sphi 0, %s70
      %s72 = sphi 0, %s70
      %s73 = sphi 0, %s72
      %s87 = sphi 0, %s73
      %s93 = sphi 0, %s95
      %s96 = sphi 0, %s93
      %s97 = sphi 0, %s96
      %s113 = sphi 0, %s97
    $region4: #{tpu_custom_call.1} parent=1 // loop_header_branch
      %18 = sbr.rel (%p16) target = $region8
    $region5: #{tpu_custom_call.1} parent=1 // loop_body
      %s20 = ssub.s32 %s15, 1
      %s21 = ssub.s32 %s15, 2
      %s22 = sadd.s32 %s15, 1
      %s23 = ssub.s32 %s15, %s22
      %p24 = scmp.eq.s32.totalorder %s23, 0
      %s26 = sadd.s32 %s25, 1
      %s27 = scalar_select %p24, %s25, %s26
      %p30 = pneg %p24
      %p31 = scmp.eq.s32.totalorder %s15, 3
      %p32 = por %p30, %p31
      %p33 = scmp.ne.s32.totalorder %s25, %s28
      %p34 = scmp.eq.s32.totalorder %s15, 0
      %p35 = por %p33, %p34
      %p36 = scmp.ne.s32.totalorder %s25, %s28
      %p37 = scmp.eq.s32.totalorder %s20, 3
      %p38 = por %p36, %p37
      %p39 = scmp.ne.s32.totalorder %s28, %s29
      %p40 = scmp.eq.s32.totalorder %s20, 0
      %p41 = por %p39, %p40
      %p42 = scmp.ne.s32.totalorder %s28, %s29
      %p43 = scmp.eq.s32.totalorder %s21, 3
      %p44 = por %p42, %p43
      %p46 = scmp.ne.s32.totalorder %s29, %s45
      %p47 = scmp.eq.s32.totalorder %s21, 0
      %p48 = por %p46, %p47
      %s50 = sadd.s32 %s49, 1
      %p53 = scmp.eq.s32.totalorder %s15, 3
      %p54 = scmp.ne.s32.totalorder %s49, %s51
      %p55 = scmp.eq.s32.totalorder %s15, 0
      %p56 = por %p54, %p55
      %p57 = scmp.ne.s32.totalorder %s49, %s51
      %p58 = scmp.eq.s32.totalorder %s20, 3
      %p59 = por %p57, %p58
      %p60 = scmp.ne.s32.totalorder %s51, %s52
      %p61 = scmp.eq.s32.totalorder %s20, 0
      %p62 = por %p60, %p61
      %p63 = scmp.ne.s32.totalorder %s51, %s52
      %p64 = scmp.eq.s32.totalorder %s21, 3
      %p65 = por %p63, %p64
      %p67 = scmp.ne.s32.totalorder %s52, %s66
      %p68 = scmp.eq.s32.totalorder %s21, 0
      %p69 = por %p67, %p68
      %s71 = sadd.s32 %s70, 1
      %p74 = scmp.eq.s32.totalorder %s15, 3
      %p75 = scmp.ne.s32.totalorder %s70, %s72
      %p76 = scmp.eq.s32.totalorder %s15, 0
      %p77 = por %p75, %p76
      %p78 = scmp.ne.s32.totalorder %s70, %s72
      %p79 = scmp.eq.s32.totalorder %s20, 3
      %p80 = por %p78, %p79
      %p81 = scmp.ne.s32.totalorder %s72, %s73
      %p82 = scmp.eq.s32.totalorder %s20, 0
      %p83 = por %p81, %p82
      %p84 = scmp.ne.s32.totalorder %s72, %s73
      %p85 = scmp.eq.s32.totalorder %s21, 3
      %p86 = por %p84, %p85
      %p88 = scmp.ne.s32.totalorder %s73, %s87
      %p89 = scmp.eq.s32.totalorder %s21, 0
      %p90 = por %p88, %p89
      %s91 = ssub.s32 %s15, %s22
      %p92 = scmp.eq.s32.totalorder %s91, 0
      %s94 = sadd.s32 %s93, 1
      %s95 = scalar_select %p92, %s93, %s94
      %p98 = pneg %p92
      %p99 = scmp.eq.s32.totalorder %s15, 3
      %p100 = por %p98, %p99
      %p101 = scmp.ne.s32.totalorder %s93, %s96
      %p102 = scmp.eq.s32.totalorder %s15, 0
      %p103 = por %p101, %p102
      %p104 = scmp.ne.s32.totalorder %s93, %s96
      %p105 = scmp.eq.s32.totalorder %s20, 3
      %p106 = por %p104, %p105
      %p107 = scmp.ne.s32.totalorder %s96, %s97
      %p108 = scmp.eq.s32.totalorder %s20, 0
      %p109 = por %p107, %p108
      %p110 = scmp.ne.s32.totalorder %s96, %s97
      %p111 = scmp.eq.s32.totalorder %s21, 3
      %p112 = por %p110, %p111
      %p114 = scmp.ne.s32.totalorder %s97, %s113
      %p115 = scmp.eq.s32.totalorder %s21, 0
      %p116 = por %p114, %p115
      %p117 = scmp.le.s32.totalorder 1, %s15
      %p118 = scmp.lt.s32.totalorder %s15, 5
      %p119 = pnand %p117, %p118
      %p120 = pneg %p119
      // Predicated region
      $region9: #{tpu_custom_call.1} parent=5 // pred_check
        _
      $region10: #{tpu_custom_call.1} parent=5 // pred_check_branch
        %122 = sbr.rel (%p119) target = $region12
      $region11: #{tpu_custom_call.1} parent=5 // pred_region
        %s123 = ssub.s32 %s15, 1
        // Predicated region
        $region13: #{tpu_custom_call.1} parent=11 // pred_check
          %p124 = pneg %p62
        $region14: #{tpu_custom_call.1} parent=11 // pred_check_branch
          %126 = sbr.rel (%p124) target = $region16
        $region15: #{tpu_custom_call.1} parent=11 // pred_region
          _
        $region16: #{tpu_custom_call.1} parent=11 // pred_fallthru
          _
        // Predicated region
        $region17: #{tpu_custom_call.1} parent=11 // pred_check
          %p127 = pneg %p83
        $region18: #{tpu_custom_call.1} parent=11 // pred_check_branch
          %129 = sbr.rel (%p127) target = $region20
        $region19: #{tpu_custom_call.1} parent=11 // pred_region
          _
        $region20: #{tpu_custom_call.1} parent=11 // pred_fallthru
          _
      $region12: #{tpu_custom_call.1} parent=5 // pred_fallthru
        _
      %p130 = scmp.lt.s32.totalorder %s15, 4
      // Predicated region
      $region21: #{tpu_custom_call.1} parent=5 // pred_check
        %p131 = pneg %p130
      $region22: #{tpu_custom_call.1} parent=5 // pred_check_branch
        %133 = sbr.rel (%p131) target = $region24
      $region23: #{tpu_custom_call.1} parent=5 // pred_region
        // Predicated region
        $region25: #{tpu_custom_call.1} parent=23 // pred_check
          %p134 = pneg %p35
        $region26: #{tpu_custom_call.1} parent=23 // pred_check_branch
          %136 = sbr.rel (%p134) target = $region28
        $region27: #{tpu_custom_call.1} parent=23 // pred_region
          %s137 = sand.u32 %s25, 1
          %s138 = scalar_lea.sflag [#allocation3], %s137
          %s139 = sand.u32 %s25, 1
          %s140 = smul.addr %s139, 128
          %s141 = scalar_lea.vmem [#allocation2], %s140
          %s142 = smul.u32 16, %s15
          %s144 = ssub.s32 2048, 2048
          %145 = vsyncadd %s138, %s144
          %s146 = smul.addr %s142, 128
          %s147 = scalar_lea.hbm %s0, %s146
          %s148 = sshll.u32 %s141, 4
          %s149 = int_to_ptr.vmem [resolvable:$true] %s148
          %154 = dma.hbm_to_vmem [thread:$0]  %s147, 2048, %s149, %s138, 128, 128, 8
        $region28: #{tpu_custom_call.1} parent=23 // pred_fallthru
          _
      $region24: #{tpu_custom_call.1} parent=5 // pred_fallthru
        _
      %p155 = scmp.le.s32.totalorder 1, %s15
      %p156 = scmp.lt.s32.totalorder %s15, 5
      %p157 = pnand %p155, %p156
      %p158 = pneg %p157
      // Predicated region
      $region29: #{tpu_custom_call.1} parent=5 // pred_check
        _
      $region30: #{tpu_custom_call.1} parent=5 // pred_check_branch
        %160 = sbr.rel (%p157) target = $region32
      $region31: #{tpu_custom_call.1} parent=5 // pred_region
        %s161 = ssub.s32 %s15, 1
        %s162 = sand.u32 %s28, 1
        %s163 = scalar_lea.sflag [#allocation3], %s162
        %s164 = sand.u32 %s28, 1
        %s165 = smul.addr %s164, 128
        %s166 = scalar_lea.vmem [#allocation2], %s165
        // Predicated region
        $region33: #{tpu_custom_call.1} parent=31 // pred_check
          %p167 = pneg %p41
        $region34: #{tpu_custom_call.1} parent=31 // pred_check_branch
          %169 = sbr.rel (%p167) target = $region36
        $region35: #{tpu_custom_call.1} parent=31 // pred_region
          %170 = dma.done %s163, 2048
        $region36: #{tpu_custom_call.1} parent=31 // pred_fallthru
          _
        %s171 = sand.u32 %s28, 1
        %s172 = scalar_lea.sflag [#allocation3], %s171
        %s173 = sand.u32 %s28, 1
        %s174 = smul.addr %s173, 128
        %s175 = scalar_lea.vmem [#allocation2], %s174
        %p176 = pneg %p41
        %p177 = pneg %p38
        %p178 = pneg %p62
        %p179 = pneg %p59
        %p180 = pneg %p83
        %p181 = pneg %p80
        %p182 = pneg %p109
        %p183 = pneg %p106
        %s184 = sand.u32 %s96, 1
        %s185 = scalar_lea.sflag [#allocation4], %s184
        %s186 = sand.u32 %s96, 1
        %s187 = smul.addr %s186, 64
        %s188 = scalar_lea.vmem [#allocation5], %s187
        %s189 = smul.u32 16, %s20
        %s190 = smul.u32 16, %s20
        %v191 = vld [vmem:[%s166] sm:$0xff]
        %v192 = vld [vmem:[%s166 + $0x8] sm:$0xff]
        %v193 = vld [vmem:[%s166 + $0x10] sm:$0xff]
        %v194 = vld [vmem:[%s166 + $0x18] sm:$0xff]
        %v195 = vld [vmem:[%s166 + $0x20] sm:$0xff]
        %v196 = vld [vmem:[%s166 + $0x28] sm:$0xff]
        %v197 = vld [vmem:[%s166 + $0x30] sm:$0xff]
        %v198 = vld [vmem:[%s166 + $0x38] sm:$0xff]
        %v199 = vld [vmem:[%s166 + $0x40] sm:$0xff]
        %v200 = vld [vmem:[%s166 + $0x48] sm:$0xff]
        %v201 = vld [vmem:[%s166 + $0x50] sm:$0xff]
        %v202 = vld [vmem:[%s166 + $0x58] sm:$0xff]
        %v203 = vld [vmem:[%s166 + $0x60] sm:$0xff]
        %v204 = vld [vmem:[%s166 + $0x68] sm:$0xff]
        %v205 = vld [vmem:[%s166 + $0x70] sm:$0xff]
        %v206 = vld [vmem:[%s166 + $0x78] sm:$0xff]
        %v207 = vlaneseq
        %v208 = vand.u32 %v207, 127
        %vm209 = vcmp.lt.s32.totalorder %v208, 32
        %v210 = vsel %vm209, 1, 0
        %v211 = vcvt.s32.f32 %v210
        %212 = vadd.xlane.f32.xlu0 %v191
        %v213 = vpop.xlane.xlu0 %212
        %214 = vadd.xlane.f32.xlu0 %v192
        %v215 = vpop.xlane.xlu0 %214
        %216 = vadd.xlane.f32.xlu0 %v193
        %v217 = vpop.xlane.xlu0 %216
        %218 = vadd.xlane.f32.xlu0 %v194
        %v219 = vpop.xlane.xlu0 %218
        %220 = vadd.xlane.f32.xlu0 %v195
        %v221 = vpop.xlane.xlu0 %220
        %222 = vadd.xlane.f32.xlu0 %v196
        %v223 = vpop.xlane.xlu0 %222
        %224 = vadd.xlane.f32.xlu0 %v197
        %v225 = vpop.xlane.xlu0 %224
        %226 = vadd.xlane.f32.xlu0 %v198
        %v227 = vpop.xlane.xlu0 %226
        %228 = vadd.xlane.f32.xlu0 %v199
        %v229 = vpop.xlane.xlu0 %228
        %230 = vadd.xlane.f32.xlu0 %v200
        %v231 = vpop.xlane.xlu0 %230
        %232 = vadd.xlane.f32.xlu0 %v201
        %v233 = vpop.xlane.xlu0 %232
        %234 = vadd.xlane.f32.xlu0 %v202
        %v235 = vpop.xlane.xlu0 %234
        %236 = vadd.xlane.f32.xlu0 %v203
        %v237 = vpop.xlane.xlu0 %236
        %238 = vadd.xlane.f32.xlu0 %v204
        %v239 = vpop.xlane.xlu0 %238
        %240 = vadd.xlane.f32.xlu0 %v205
        %v241 = vpop.xlane.xlu0 %240
        %242 = vadd.xlane.f32.xlu0 %v206
        %v243 = vpop.xlane.xlu0 %242
        %v244 = vmul.f32 %v213, 0.03125
        %v245 = vmul.f32 %v215, 0.03125
        %v246 = vmul.f32 %v217, 0.03125
        %v247 = vmul.f32 %v219, 0.03125
        %v248 = vmul.f32 %v221, 0.03125
        %v249 = vmul.f32 %v223, 0.03125
        %v250 = vmul.f32 %v225, 0.03125
        %v251 = vmul.f32 %v227, 0.03125
        %v252 = vmul.f32 %v229, 0.03125
        %v253 = vmul.f32 %v231, 0.03125
        %v254 = vmul.f32 %v233, 0.03125
        %v255 = vmul.f32 %v235, 0.03125
        %v256 = vmul.f32 %v237, 0.03125
        %v257 = vmul.f32 %v239, 0.03125
        %v258 = vmul.f32 %v241, 0.03125
        %v259 = vmul.f32 %v243, 0.03125
        %v260 = vsub.f32 %v191, %v244
        %v261 = vsub.f32 %v192, %v245
        %v262 = vsub.f32 %v193, %v246
        %v263 = vsub.f32 %v194, %v247
        %v264 = vsub.f32 %v195, %v248
        %v265 = vsub.f32 %v196, %v249
        %v266 = vsub.f32 %v197, %v250
        %v267 = vsub.f32 %v198, %v251
        %v268 = vsub.f32 %v199, %v252
        %v269 = vsub.f32 %v200, %v253
        %v270 = vsub.f32 %v201, %v254
        %v271 = vsub.f32 %v202, %v255
        %v272 = vsub.f32 %v203, %v256
        %v273 = vsub.f32 %v204, %v257
        %v274 = vsub.f32 %v205, %v258
        %v275 = vsub.f32 %v206, %v259
        %v276 = vmul.f32 %v260, %v211
        %v277 = vmul.f32 %v261, %v211
        %v278 = vmul.f32 %v262, %v211
        %v279 = vmul.f32 %v263, %v211
        %v280 = vmul.f32 %v264, %v211
        %v281 = vmul.f32 %v265, %v211
        %v282 = vmul.f32 %v266, %v211
        %v283 = vmul.f32 %v267, %v211
        %v284 = vmul.f32 %v268, %v211
        %v285 = vmul.f32 %v269, %v211
        %v286 = vmul.f32 %v270, %v211
        %v287 = vmul.f32 %v271, %v211
        %v288 = vmul.f32 %v272, %v211
        %v289 = vmul.f32 %v273, %v211
        %v290 = vmul.f32 %v274, %v211
        %v291 = vmul.f32 %v275, %v211
        %v292 = vmul.f32 %v276, %v276
        %v293 = vmul.f32 %v277, %v277
        %v294 = vmul.f32 %v278, %v278
        %v295 = vmul.f32 %v279, %v279
        %v296 = vmul.f32 %v280, %v280
        %v297 = vmul.f32 %v281, %v281
        %v298 = vmul.f32 %v282, %v282
        %v299 = vmul.f32 %v283, %v283
        %v300 = vmul.f32 %v284, %v284
        %v301 = vmul.f32 %v285, %v285
        %v302 = vmul.f32 %v286, %v286
        %v303 = vmul.f32 %v287, %v287
        %v304 = vmul.f32 %v288, %v288
        %v305 = vmul.f32 %v289, %v289
        %v306 = vmul.f32 %v290, %v290
        %v307 = vmul.f32 %v291, %v291
        %308 = vadd.xlane.f32.xlu0 %v292
        %v309 = vpop.xlane.xlu0 %308
        %310 = vadd.xlane.f32.xlu0 %v293
        %v311 = vpop.xlane.xlu0 %310
        %312 = vadd.xlane.f32.xlu0 %v294
        %v313 = vpop.xlane.xlu0 %312
        %314 = vadd.xlane.f32.xlu0 %v295
        %v315 = vpop.xlane.xlu0 %314
        %316 = vadd.xlane.f32.xlu0 %v296
        %v317 = vpop.xlane.xlu0 %316
        %318 = vadd.xlane.f32.xlu0 %v297
        %v319 = vpop.xlane.xlu0 %318
        %320 = vadd.xlane.f32.xlu0 %v298
        %v321 = vpop.xlane.xlu0 %320
        %322 = vadd.xlane.f32.xlu0 %v299
        %v323 = vpop.xlane.xlu0 %322
        %324 = vadd.xlane.f32.xlu0 %v300
        %v325 = vpop.xlane.xlu0 %324
        %326 = vadd.xlane.f32.xlu0 %v301
        %v327 = vpop.xlane.xlu0 %326
        %328 = vadd.xlane.f32.xlu0 %v302
        %v329 = vpop.xlane.xlu0 %328
        %330 = vadd.xlane.f32.xlu0 %v303
        %v331 = vpop.xlane.xlu0 %330
        %332 = vadd.xlane.f32.xlu0 %v304
        %v333 = vpop.xlane.xlu0 %332
        %334 = vadd.xlane.f32.xlu0 %v305
        %v335 = vpop.xlane.xlu0 %334
        %336 = vadd.xlane.f32.xlu0 %v306
        %v337 = vpop.xlane.xlu0 %336
        %338 = vadd.xlane.f32.xlu0 %v307
        %v339 = vpop.xlane.xlu0 %338
        %v340 = vmul.f32 %v309, 0.03125
        %v341 = vmul.f32 %v311, 0.03125
        %v342 = vmul.f32 %v313, 0.03125
        %v343 = vmul.f32 %v315, 0.03125
        %v344 = vmul.f32 %v317, 0.03125
        %v345 = vmul.f32 %v319, 0.03125
        %v346 = vmul.f32 %v321, 0.03125
        %v347 = vmul.f32 %v323, 0.03125
        %v348 = vmul.f32 %v325, 0.03125
        %v349 = vmul.f32 %v327, 0.03125
        %v350 = vmul.f32 %v329, 0.03125
        %v351 = vmul.f32 %v331, 0.03125
        %v352 = vmul.f32 %v333, 0.03125
        %v353 = vmul.f32 %v335, 0.03125
        %v354 = vmul.f32 %v337, 0.03125
        %v355 = vmul.f32 %v339, 0.03125
        %v356 = vadd.f32 %v340, 1e-05
        %v357 = vadd.f32 %v341, 1e-05
        %v358 = vadd.f32 %v342, 1e-05
        %v359 = vadd.f32 %v343, 1e-05
        %v360 = vadd.f32 %v344, 1e-05
        %v361 = vadd.f32 %v345, 1e-05
        %v362 = vadd.f32 %v346, 1e-05
        %v363 = vadd.f32 %v347, 1e-05
        %v364 = vadd.f32 %v348, 1e-05
        %v365 = vadd.f32 %v349, 1e-05
        %v366 = vadd.f32 %v350, 1e-05
        %v367 = vadd.f32 %v351, 1e-05
        %v368 = vadd.f32 %v352, 1e-05
        %v369 = vadd.f32 %v353, 1e-05
        %v370 = vadd.f32 %v354, 1e-05
        %v371 = vadd.f32 %v355, 1e-05
        %v372 = vrsqrt.pop %v356
        %v373 = vrsqrt.pop %v357
        %v374 = vrsqrt.pop %v358
        %v375 = vrsqrt.pop %v359
        %v376 = vrsqrt.pop %v360
        %v377 = vrsqrt.pop %v361
        %v378 = vrsqrt.pop %v362
        %v379 = vrsqrt.pop %v363
        %v380 = vrsqrt.pop %v364
        %v381 = vrsqrt.pop %v365
        %v382 = vrsqrt.pop %v366
        %v383 = vrsqrt.pop %v367
        %v384 = vrsqrt.pop %v368
        %v385 = vrsqrt.pop %v369
        %v386 = vrsqrt.pop %v370
        %v387 = vrsqrt.pop %v371
        %v388 = vmul.f32 %v276, %v372
        %v389 = vmul.f32 %v277, %v373
        %v390 = vmul.f32 %v278, %v374
        %v391 = vmul.f32 %v279, %v375
        %v392 = vmul.f32 %v280, %v376
        %v393 = vmul.f32 %v281, %v377
        %v394 = vmul.f32 %v282, %v378
        %v395 = vmul.f32 %v283, %v379
        %v396 = vmul.f32 %v284, %v380
        %v397 = vmul.f32 %v285, %v381
        %v398 = vmul.f32 %v286, %v382
        %v399 = vmul.f32 %v287, %v383
        %v400 = vmul.f32 %v288, %v384
        %v401 = vmul.f32 %v289, %v385
        %v402 = vmul.f32 %v290, %v386
        %v403 = vmul.f32 %v291, %v387
        %v404 = vld [vmem:[%s1] sm:$0x1]
        %v406 = vlaneseq
        %v407 = vshrl.u32 %v406, 7
        %v408 = vsub.s32 0, %v407
        %v409 = vrot.slane %v404, %v408
        %v411 = vmul.f32 %v388, %v409
        %v412 = vmul.f32 %v389, %v409
        %v413 = vmul.f32 %v390, %v409
        %v414 = vmul.f32 %v391, %v409
        %v415 = vmul.f32 %v392, %v409
        %v416 = vmul.f32 %v393, %v409
        %v417 = vmul.f32 %v394, %v409
        %v418 = vmul.f32 %v395, %v409
        %v419 = vmul.f32 %v396, %v409
        %v420 = vmul.f32 %v397, %v409
        %v421 = vmul.f32 %v398, %v409
        %v422 = vmul.f32 %v399, %v409
        %v423 = vmul.f32 %v400, %v409
        %v424 = vmul.f32 %v401, %v409
        %v425 = vmul.f32 %v402, %v409
        %v426 = vmul.f32 %v403, %v409
        %v427 = vld [vmem:[%s2] sm:$0x1]
        %v429 = vlaneseq
        %v430 = vshrl.u32 %v429, 7
        %v431 = vsub.s32 0, %v430
        %v432 = vrot.slane %v427, %v431
        %v434 = vadd.f32 %v411, %v432
        %v435 = vadd.f32 %v412, %v432
        %v436 = vadd.f32 %v413, %v432
        %v437 = vadd.f32 %v414, %v432
        %v438 = vadd.f32 %v415, %v432
        %v439 = vadd.f32 %v416, %v432
        %v440 = vadd.f32 %v417, %v432
        %v441 = vadd.f32 %v418, %v432
        %v442 = vadd.f32 %v419, %v432
        %v443 = vadd.f32 %v420, %v432
        %v444 = vadd.f32 %v421, %v432
        %v445 = vadd.f32 %v422, %v432
        %v446 = vadd.f32 %v423, %v432
        %v447 = vadd.f32 %v424, %v432
        %v448 = vadd.f32 %v425, %v432
        %v449 = vadd.f32 %v426, %v432
        %v450 = vmax.f32 %v434, 0.0
        %v451 = vmax.f32 %v435, 0.0
        %v452 = vmax.f32 %v436, 0.0
        %v453 = vmax.f32 %v437, 0.0
        %v454 = vmax.f32 %v438, 0.0
        %v455 = vmax.f32 %v439, 0.0
        %v456 = vmax.f32 %v440, 0.0
        %v457 = vmax.f32 %v441, 0.0
        %v458 = vmax.f32 %v442, 0.0
        %v459 = vmax.f32 %v443, 0.0
        %v460 = vmax.f32 %v444, 0.0
        %v461 = vmax.f32 %v445, 0.0
        %v462 = vmax.f32 %v446, 0.0
        %v463 = vmax.f32 %v447, 0.0
        %v464 = vmax.f32 %v448, 0.0
        %v465 = vmax.f32 %v449, 0.0
        %v466 = vpack.c.bf16 %v451, %v450
        %v467 = vpack.c.bf16 %v453, %v452
        %v468 = vpack.c.bf16 %v455, %v454
        %v469 = vpack.c.bf16 %v457, %v456
        %v470 = vpack.c.bf16 %v459, %v458
        %v471 = vpack.c.bf16 %v461, %v460
        %v472 = vpack.c.bf16 %v463, %v462
        %v473 = vpack.c.bf16 %v465, %v464
        %v482 = vunpack.c.l.b16 %v466
        %v483 = vunpack.c.h.b16 %v466
        %v484 = vunpack.c.l.b16 %v467
        %v485 = vunpack.c.h.b16 %v467
        %v486 = vunpack.c.l.b16 %v468
        %v487 = vunpack.c.h.b16 %v468
        %v488 = vunpack.c.l.b16 %v469
        %v489 = vunpack.c.h.b16 %v469
        %v490 = vunpack.c.l.b16 %v470
        %v491 = vunpack.c.h.b16 %v470
        %v492 = vunpack.c.l.b16 %v471
        %v493 = vunpack.c.h.b16 %v471
        %v494 = vunpack.c.l.b16 %v472
        %v495 = vunpack.c.h.b16 %v472
        %v496 = vunpack.c.l.b16 %v473
        %v497 = vunpack.c.h.b16 %v473
        %v498 = vpack.c.b16 %v482, %v482
        %v499 = vpack.c.b16 %v483, %v483
        %v500 = vpack.c.b16 %v484, %v484
        %v501 = vpack.c.b16 %v485, %v485
        %v502 = vpack.c.b16 %v486, %v486
        %v503 = vpack.c.b16 %v487, %v487
        %v504 = vpack.c.b16 %v488, %v488
        %v505 = vpack.c.b16 %v489, %v489
        %v506 = vpack.c.b16 %v490, %v490
        %v507 = vpack.c.b16 %v491, %v491
        %v508 = vpack.c.b16 %v492, %v492
        %v509 = vpack.c.b16 %v493, %v493
        %v510 = vpack.c.b16 %v494, %v494
        %v511 = vpack.c.b16 %v495, %v495
        %v512 = vpack.c.b16 %v496, %v496
        %v513 = vpack.c.b16 %v497, %v497
        %530 = vst [vmem:[%s188] sm:$0xf] %v498
        %531 = vst [vmem:[%s188 + $0x4] sm:$0xf] %v499
        %532 = vst [vmem:[%s188 + $0x8] sm:$0xf] %v500
        %533 = vst [vmem:[%s188 + $0xc] sm:$0xf] %v501
        %534 = vst [vmem:[%s188 + $0x10] sm:$0xf] %v502
        %535 = vst [vmem:[%s188 + $0x14] sm:$0xf] %v503
        %536 = vst [vmem:[%s188 + $0x18] sm:$0xf] %v504
        %537 = vst [vmem:[%s188 + $0x1c] sm:$0xf] %v505
        %538 = vst [vmem:[%s188 + $0x20] sm:$0xf] %v506
        %539 = vst [vmem:[%s188 + $0x24] sm:$0xf] %v507
        %540 = vst [vmem:[%s188 + $0x28] sm:$0xf] %v508
        %541 = vst [vmem:[%s188 + $0x2c] sm:$0xf] %v509
        %542 = vst [vmem:[%s188 + $0x30] sm:$0xf] %v510
        %543 = vst [vmem:[%s188 + $0x34] sm:$0xf] %v511
        %544 = vst [vmem:[%s188 + $0x38] sm:$0xf] %v512
        %545 = vst [vmem:[%s188 + $0x3c] sm:$0xf] %v513
        %s546 = sand.u32 %s96, 1
        %s547 = scalar_lea.sflag [#allocation4], %s546
        %s548 = sand.u32 %s96, 1
        %s549 = smul.addr %s548, 64
        %s550 = scalar_lea.vmem [#allocation5], %s549
        // Predicated region
        $region37: #{tpu_custom_call.1} parent=31 // pred_check
          %p551 = pneg %p106
        $region38: #{tpu_custom_call.1} parent=31 // pred_check_branch
          %553 = sbr.rel (%p551) target = $region40
        $region39: #{tpu_custom_call.1} parent=31 // pred_region
          %s554 = smul.u32 16, %s20
          %s556 = ssub.s32 1024, 1024
          %557 = vsyncadd %s547, %s556
          %s558 = smul.addr %s554, 64
          %s559 = scalar_lea.hbm %s3, %s558
          %s560 = sshll.u32 %s550, 4
          %s561 = int_to_ptr.vmem [resolvable:$true] %s560
          %566 = dma.vmem_to_hbm [thread:$0]  %s561, 1024, %s559, %s547, 64, 64, 4
        $region40: #{tpu_custom_call.1} parent=31 // pred_fallthru
          _
      $region32: #{tpu_custom_call.1} parent=5 // pred_fallthru
        _
      %p567 = scmp.le.s32.totalorder 2, %s15
      // Predicated region
      $region41: #{tpu_custom_call.1} parent=5 // pred_check
        %p568 = pneg %p567
      $region42: #{tpu_custom_call.1} parent=5 // pred_check_branch
        %570 = sbr.rel (%p568) target = $region44
      $region43: #{tpu_custom_call.1} parent=5 // pred_region
        %s571 = ssub.s32 %s15, 2
        // Predicated region
        $region45: #{tpu_custom_call.1} parent=43 // pred_check
          %p572 = pneg %p112
        $region46: #{tpu_custom_call.1} parent=43 // pred_check_branch
          %574 = sbr.rel (%p572) target = $region48
        $region47: #{tpu_custom_call.1} parent=43 // pred_region
          %s575 = sand.u32 %s97, 1
          %s576 = scalar_lea.sflag [#allocation4], %s575
          %s577 = sand.u32 %s97, 1
          %s578 = smul.addr %s577, 64
          %s579 = scalar_lea.vmem [#allocation5], %s578
          %580 = dma.done %s576, 1024
        $region48: #{tpu_custom_call.1} parent=43 // pred_fallthru
          _
      $region44: #{tpu_custom_call.1} parent=5 // pred_fallthru
        _
    $region6: #{tpu_custom_call.1} parent=1 // loop_footer
      %s19 = sadd.s32 1, %s15
    $region7: #{tpu_custom_call.1} parent=1 // loop_footer_branch
      %14 = sbr.rel target = $region3
    $region8: #{tpu_custom_call.1} parent=1 // loop_exit
      _
    %581 = vsyncpa [#allocation3], 1
    %s582 = scalar_lea.sflag [#allocation3], 1
    %583 = vsyncpa %s582, 1
    %584 = vsyncpa [#allocation4], 1
    %s585 = scalar_lea.sflag [#allocation4], 1
    %586 = vsyncpa %s585, 1

</llo_original>
